<compile_context>
chip_gen: v5e
topology: v5e:2x2
jax: 0.10.0
libtpu: 0.0.40
codegen_flags: <defaults>
</compile_context>

<pallas_src>
import functools

import numpy as np
import jax
import jax.numpy as jnp
from jax import lax
from jax.experimental import pallas as pl
from jax.experimental.pallas import tpu as pltpu


def _round_up(x: int, m: int) -> int:
    return ((x + m - 1) // m) * m


def _choose_tile_s(num_label: int, num_seq: int) -> int:
    """Frames per tile: lane-dense (multiple of 128), sized from a total-VMEM
    budget that fits v5e/v6e/v7x once vmem_limit_bytes is raised."""
    l_vmem = _round_up(num_label, 8)
    # Double-buffered: one f32 (l_vmem, t) input block + two (1, t) int32 output
    # blocks (Mosaic pads the 1 sublane up to 8).
    bytes_per_frame = 2 * (l_vmem * 4 + 2 * 8 * 4)
    budget = 24 * 1024 * 1024
    t = (budget // bytes_per_frame) // 128 * 128
    t = max(128, t)
    # Split the sequence evenly over the minimum number of tiles so the tail
    # padding stays below 128 frames per tile.
    n = -(-num_seq // t)
    t = min(t, max(128, _round_up(-(-num_seq // n), 128)))
    return t


def _argmax_keep_kernel(num_label, blank, assume_finite, em_ref, idx_ref, keep_ref):
    """Fused first-occurrence argmax over labels (sublane axis) + CTC keep mask.

    em_ref:   (num_label, tile_s) logits
    idx_ref:  (1, tile_s) int32 best label per frame
    keep_ref: (1, tile_s) int32 keep flag; lane 0 of each tile uses a
              wrapped-around prev (fixed up in the wrapper).
    """
    x = em_ref[...]                                          # (L, T)
    if not assume_finite:
        # torch.argmax treats NaN as the maximum -> map NaN to +inf so the
        # first NaN position wins.  Gated off by default for perf.
        x = jnp.where(jnp.isnan(x), jnp.inf, x)

    m = jnp.max(x, axis=0, keepdims=True)                    # (1, T) sublane reduce
    lab = lax.broadcasted_iota(jnp.int32, x.shape, 0)        # label id per sublane
    cand = jnp.where(x == m, lab, jnp.int32(num_label))      # non-max -> sentinel
    best = jnp.min(cand, axis=0, keepdims=True)              # first occurrence wins
    # Safety clamp (only reachable if NaNs slip through assume_finite=True).
    best = jnp.minimum(best, jnp.int32(num_label - 1)).astype(jnp.int32)
    idx_ref[...] = best

    # prev[t] = best[t-1] within the tile; lane 0 wraps and is fixed outside.
    prev = pltpu.roll(best, 1, axis=1)                       # XLU slot, ~free
    keep = jnp.logical_and(best != prev, best != jnp.int32(blank))
    keep_ref[...] = keep.astype(jnp.int32)


@functools.partial(jax.jit, static_argnums=(1, 2, 3))
def greedy_ctc_device(emission: jax.Array, blank: int,
                      assume_finite: bool = True, tile_s=None):
    """emission [num_seq, num_label] -> (idx [num_seq] int32, keep [num_seq] int32)."""
    S, L = emission.shape
    if tile_s is None:
        tile_s = _choose_tile_s(L, S)
    s_pad = _round_up(S, tile_s)
    num_tiles = s_pad // tile_s

    # Layout plumbing: labels on sublanes, frames lane-dense.
    # TODO(synk): drop this transpose if the producer can emit (L, S) directly;
    # it is the only remaining extra full HBM pass over the emission.
    em_t = jnp.transpose(emission)                           # (L, S)
    if s_pad != S:
        em_t = jnp.pad(em_t, ((0, 0), (0, s_pad - S)))       # padded frames sliced off

    kernel = functools.partial(_argmax_keep_kernel, L, blank, assume_finite)
    idx, keep = pl.pallas_call(
        kernel,
        out_shape=(jax.ShapeDtypeStruct((1, s_pad), jnp.int32),
                   jax.ShapeDtypeStruct((1, s_pad), jnp.int32)),
        grid=(num_tiles,),
        in_specs=[pl.BlockSpec((L, tile_s), lambda i: (0, i))],
        out_specs=(pl.BlockSpec((1, tile_s), lambda i: (0, i)),
                   pl.BlockSpec((1, tile_s), lambda i: (0, i))),
        compiler_params=pltpu.CompilerParams(
            dimension_semantics=("parallel",),
            vmem_limit_bytes=40 * 1024 * 1024),
    )(em_t)

    idx = idx[0, :S]
    keep = keep[0, :S]

    # Fix the first frame of every tile: in-kernel prev wrapped around the tile.
    # Tile starts are all < S by construction (never a padded frame).
    starts = jnp.asarray(np.arange(num_tiles, dtype=np.int32) * tile_s)
    prev_b = jnp.where(starts == 0, jnp.int32(-1),
                       idx[jnp.maximum(starts - 1, 0)])
    cur_b = idx[starts]
    fix = jnp.logical_and(cur_b != prev_b,
                          cur_b != jnp.int32(blank)).astype(jnp.int32)
    keep = keep.at[starts].set(fix)
    return idx, keep


class GreedyCTCDecoder:
    """JAX/Pallas re-implementation of the PyTorch GreedyCTCDecoder forward."""

    def __init__(self, labels, blank=10):
        self.labels = labels
        self.blank = blank

    def __call__(self, emission: jax.Array) -> str:
        idx, keep = greedy_ctc_device(emission, self.blank, True, None)
        idx = np.asarray(jax.block_until_ready(idx))
        keep = np.asarray(keep).astype(bool)
        # TODO(synk): the variable-length label compaction + string join has no
        # clean Pallas equivalent; only this join runs on the host.
        return "".join(self.labels[int(i)] for i in idx[keep])


if __name__ == "__main__":
    labels = list("abcdefghij-klmno")       # 16 labels, index 10 ('-') is the blank
    blank = 10
    decoder = GreedyCTCDecoder(labels, blank=blank)

    key = jax.random.PRNGKey(0)
    k1, k2 = jax.random.split(key)

    # --- Test 1: tiny emission (single tile), full decode path ---------------
    num_seq, num_label = 8, 16
    emission = jax.random.normal(k1, (num_seq, num_label), dtype=jnp.float32)

    idx, keep = greedy_ctc_device(emission, blank, True, None)
    idx = np.asarray(jax.block_until_ready(idx))
    keep = np.asarray(keep).astype(bool)

    ref_idx = np.asarray(jnp.argmax(emission, axis=-1)).astype(np.int32)
    assert np.array_equal(idx, ref_idx), "Pallas argmax mismatch vs reference"

    ref_chars, prev = [], None
    for i in ref_idx.tolist():
        if i != prev and i != blank:
            ref_chars.append(labels[i])
        prev = i
    ref_transcript = "".join(ref_chars)

    transcript = decoder(emission)
    assert isinstance(transcript, str)
    assert transcript == ref_transcript, (transcript, ref_transcript)

    # --- Test 2: multi-tile path (forced small tile) exercises the fused
    #             roll-based keep mask and the tile-boundary fix-up -----------
    num_seq2 = 400
    emission2 = jax.random.normal(k2, (num_seq2, num_label), dtype=jnp.float32)
    idx2, keep2 = greedy_ctc_device(emission2, blank, True, 128)
    idx2 = np.asarray(jax.block_until_ready(idx2))
    keep2 = np.asarray(keep2).astype(bool)

    ref_idx2 = np.asarray(jnp.argmax(emission2, axis=-1)).astype(np.int32)
    ref_prev2 = np.concatenate([np.array([-1], np.int32), ref_idx2[:-1]])
    ref_keep2 = (ref_idx2 != ref_prev2) & (ref_idx2 != blank)
    assert np.array_equal(idx2, ref_idx2), "multi-tile argmax mismatch"
    assert np.array_equal(keep2, ref_keep2), "multi-tile keep-mask mismatch"

    print("KERNEL_OK")
</pallas_src>

<mosaic_0001>
module attributes {stable_mosaic.version = 11 : i64} {
  func.func @_argmax_keep_kernel(%arg0: i32, %arg1: memref<16x128xf32, #tpu.memory_space<vmem>>, %arg2: memref<1x128xi32, #tpu.memory_space<vmem>>, %arg3: memref<1x128xi32, #tpu.memory_space<vmem>>) attributes {dimension_semantics = [#tpu.dimension_semantics<parallel>], iteration_bounds = array<i64: 1>, scalar_prefetch = 0 : i64, scratch_operands = 0 : i64, tpu.core_type = #tpu.core_type<tc>, window_params = [{transform_indices = @transform_0, window_bounds = array<i64: 16, 128>}, {transform_indices = @transform_1, window_bounds = array<i64: 1, 128>}, {transform_indices = @transform_2, window_bounds = array<i64: 1, 128>}]} {
    %c0 = arith.constant 0 : index
    %c0_0 = arith.constant 0 : index
    %0 = vector.load %arg1[%c0, %c0_0] : memref<16x128xf32, #tpu.memory_space<vmem>>, vector<16x128xf32>
    %cst = arith.constant dense<0xFF800000> : vector<128xf32>
    %1 = vector.multi_reduction <maximumf>, %0, %cst [0] : vector<16x128xf32> to vector<128xf32>
    %2 = vector.shape_cast %1 : vector<128xf32> to vector<1x128xf32>
    %3 = tpu.iota {dimensions = array<i32: 0>} : vector<16x128xi32>
    %4 = vector.broadcast %2 : vector<1x128xf32> to vector<16x128xf32>
    %5 = arith.cmpf oeq, %0, %4 : vector<16x128xf32>
    %c16_i32 = arith.constant 16 : i32
    %6 = vector.broadcast %c16_i32 : i32 to vector<16x128xi32>
    %7 = arith.select %5, %3, %6 : vector<16x128xi1>, vector<16x128xi32>
    %cst_1 = arith.constant dense<2147483647> : vector<128xi32>
    %8 = vector.multi_reduction <minsi>, %7, %cst_1 [0] : vector<16x128xi32> to vector<128xi32>
    %9 = vector.shape_cast %8 : vector<128xi32> to vector<1x128xi32>
    %c15_i32 = arith.constant 15 : i32
    %10 = vector.broadcast %c15_i32 : i32 to vector<1x128xi32>
    %11 = arith.minsi %9, %10 : vector<1x128xi32>
    %c0_2 = arith.constant 0 : index
    %c0_3 = arith.constant 0 : index
    %12 = vector.load %arg2[%c0_2, %c0_3] : memref<1x128xi32, #tpu.memory_space<vmem>>, vector<1x128xi32>
    tpu.vector_store %arg2[%c0_2, %c0_3], %11 {strides = array<i32>} : memref<1x128xi32, #tpu.memory_space<vmem>>, vector<1x128xi32>,
    %c1_i32 = arith.constant 1 : i32
    %13 = tpu.dynamic_rotate %11 by %c1_i32 dim 1 : vector<1x128xi32>, i32 -> vector<1x128xi32>
    %14 = arith.cmpi ne, %11, %13 : vector<1x128xi32>
    %c10_i32 = arith.constant 10 : i32
    %15 = vector.broadcast %c10_i32 : i32 to vector<1x128xi32>
    %16 = arith.cmpi ne, %11, %15 : vector<1x128xi32>
    %17 = arith.andi %14, %16 : vector<1x128xi1>
    %18 = arith.extui %17 : vector<1x128xi1> to vector<1x128xi32>
    %c0_4 = arith.constant 0 : index
    %c0_5 = arith.constant 0 : index
    %19 = vector.load %arg3[%c0_4, %c0_5] : memref<1x128xi32, #tpu.memory_space<vmem>>, vector<1x128xi32>
    tpu.vector_store %arg3[%c0_4, %c0_5], %18 {strides = array<i32>} : memref<1x128xi32, #tpu.memory_space<vmem>>, vector<1x128xi32>,
    return
  }
  func.func @transform_0(%arg0: i32) -> (i32, i32) {
    %c0_i32 = arith.constant 0 : i32
    %c0_i32_0 = arith.constant 0 : i32
    return %c0_i32, %arg0 : i32, i32
  }
  func.func @transform_1(%arg0: i32) -> (i32, i32) {
    %c0_i32 = arith.constant 0 : i32
    %c0_i32_0 = arith.constant 0 : i32
    return %c0_i32, %arg0 : i32, i32
  }
  func.func @transform_2(%arg0: i32) -> (i32, i32) {
    %c0_i32 = arith.constant 0 : i32
    %c0_i32_0 = arith.constant 0 : i32
    return %c0_i32, %arg0 : i32, i32
  }
}

</mosaic_0001>

<llo_original>
// kernel: greedy_ctc_device.1
$region0: #{greedy_ctc_device.1}
  #allocation0 [shape = 'u32[]', space=smem, size = 0x4, offset = 0x4, fixed_abs, tag = 'smem constant byte address 0x4 - core index']
  #allocation1 [shape = 'u32[72,128]{1,0:T(1,128)}', space=vmem, size = 0x9000, scoped, tag = 'internal scratch']
  %s0 = inlined_call_operand.vmem [shape: f32[16,128], index: 0, kind: input, shape index: {}]
  %s1 = inlined_call_operand.vmem [shape: s32[1,128], index: 1, kind: output, shape index: {0}]
  %s2 = inlined_call_operand.vmem [shape: s32[1,128], index: 2, kind: output, shape index: {1}]
  %3 = xla_tuple %s1, %s2
  %s4 = sld [smem:[#allocation0]]
  $region22: #{greedy_ctc_device.1} parent=0
    _
  %s6 = ssub.s32 1, %s4
  %s7 = scalar_select 0, %s6, %s4
  // Predicated region
  $region2: #{greedy_ctc_device.1} parent=0 // pred_check
    _
  $region3: #{greedy_ctc_device.1} parent=0 // pred_check_branch
    %9 = sbr.rel (0) target = $region5
  $region4: #{greedy_ctc_device.1} parent=0 // pred_region
    _
  $region5: #{greedy_ctc_device.1} parent=0 // pred_fallthru
    _
  %v10 = vld [vmem:[%s0] sm:$0xff]
  %v11 = vld [vmem:[%s0 + $0x8] sm:$0xff]
  %v12 = vmax.f32 %v10, %v11
  %v13 = vrot.slane %v12, 4
  %v14 = vmax.f32 %v12, %v13
  %v15 = vrot.slane %v14, 2
  %v16 = vmax.f32 %v14, %v15
  %v17 = vrot.slane %v16, 1
  %v18 = vmax.f32 %v16, %v17
  %v19 = vlaneseq
  %v20 = vshrl.u32 %v19, 7
  %v21 = vadd.s32 %v20, 8
  %vm22 = vcmp.eq.f32.partialorder %v10, %v18
  %vm23 = vcmp.eq.f32.partialorder %v11, %v18
  %v24 = vsel %vm22, %v20, 16
  %v25 = vsel %vm23, %v21, 16
  %vm26 = vcmp.lt.s32.totalorder %v24, %v25
  %v27 = vsel %vm26, %v24, %v25
  %v28 = vrot.slane %v27, 4
  %vm29 = vcmp.lt.s32.totalorder %v27, %v28
  %v30 = vsel %vm29, %v27, %v28
  %v31 = vrot.slane %v30, 2
  %vm32 = vcmp.lt.s32.totalorder %v30, %v31
  %v33 = vsel %vm32, %v30, %v31
  %v34 = vrot.slane %v33, 1
  %vm35 = vcmp.lt.s32.totalorder %v33, %v34
  %v36 = vsel %vm35, %v33, %v34
  %vm37 = vcmp.lt.s32.totalorder %v36, 15
  %v38 = vsel %vm37, %v36, 15
  %39 = vst [vmem:[%s1] sm:$0x1] %v38
  %40 = vrot.lane.b32.xlu0 %v38, 1
  %v41 = vpop.permute.xlu0 %40
  %vm42 = vcmp.ne.s32.totalorder %v38, %v41
  %vm43 = vcmp.ne.s32.totalorder %v38, 10
  %vm44 = vmand %vm42, %vm43
  %v45 = vsel %vm44, 1, 0
  %46 = vst [vmem:[%s2] sm:$0x1] %v45
  // Predicated region
  $region6: #{greedy_ctc_device.1} parent=0 // pred_check
    _
  $region7: #{greedy_ctc_device.1} parent=0 // pred_check_branch
    %48 = sbr.rel (0) target = $region9
  $region8: #{greedy_ctc_device.1} parent=0 // pred_region
    _
  $region9: #{greedy_ctc_device.1} parent=0 // pred_fallthru
    _
  // Predicated region
  $region10: #{greedy_ctc_device.1} parent=0 // pred_check
    _
  $region11: #{greedy_ctc_device.1} parent=0 // pred_check_branch
    %50 = sbr.rel (0) target = $region13
  $region12: #{greedy_ctc_device.1} parent=0 // pred_region
    _
  $region13: #{greedy_ctc_device.1} parent=0 // pred_fallthru
    _
  // Predicated region
  $region14: #{greedy_ctc_device.1} parent=0 // pred_check
    _
  $region15: #{greedy_ctc_device.1} parent=0 // pred_check_branch
    %52 = sbr.rel (0) target = $region17
  $region16: #{greedy_ctc_device.1} parent=0 // pred_region
    _
  $region17: #{greedy_ctc_device.1} parent=0 // pred_fallthru
    _
  // Predicated region
  $region18: #{greedy_ctc_device.1} parent=0 // pred_check
    _
  $region19: #{greedy_ctc_device.1} parent=0 // pred_check_branch
    %54 = sbr.rel (0) target = $region21
  $region20: #{greedy_ctc_device.1} parent=0 // pred_region
    _
  $region21: #{greedy_ctc_device.1} parent=0 // pred_fallthru
    _

</llo_original>
